<compile_context>
chip_gen: v5e
topology: v5e:2x2
jax: 0.10.0
libtpu: 0.0.40
codegen_flags: <defaults>
</compile_context>

<pallas_src>
import functools
import math

import jax
import jax.numpy as jnp
from jax.experimental import pallas as pl
from jax.experimental.pallas import tpu as pltpu


def _round_up(v, k):
    return (v + k - 1) // k * k


def _make_arccos_kernel(s, m):
    cos_m = math.cos(m)
    sin_m = math.sin(m)
    th = math.cos(math.pi - m)
    mm = math.sin(math.pi - m) * m

    def arccos_kernel(x_ref, w_ref, inv_wn_ref, label_ref, o_ref):
        # x_ref: (tm, F)   w_ref: (tn, F)   inv_wn_ref: (1, tn) f32
        # label_ref: (tm, 1) int32          o_ref: (tm, tn) f32
        j = pl.program_id(1)

        x = x_ref[...].astype(jnp.float32)
        # 1 / max(||x_row||, 1e-12) via rsqrt (EUP slot) — no divide.
        inv_xn = jax.lax.rsqrt(
            jnp.maximum(jnp.sum(x * x, axis=-1, keepdims=True), 1e-24))

        # bf16 MXU matmul with f32 accumulation; the contraction is expressed
        # directly on the (tn, F) weight block (no transpose).
        dot = jax.lax.dot_general(
            x.astype(jnp.bfloat16),
            w_ref[...].astype(jnp.bfloat16),
            dimension_numbers=(((1,), (1,)), ((), ())),
            preferred_element_type=jnp.float32,
        )

        # Post-matmul normalization: rows scaled by inv_xn, columns by the
        # precomputed per-class inverse weight norms.
        cosine = dot * inv_xn * inv_wn_ref[...]

        # Margin math in f32 (sqrt goes to the EUP).
        sine = jnp.sqrt(jnp.clip(1.0 - cosine * cosine, 0.0, 1.0))
        phi = cosine * cos_m - sine * sin_m
        phi = jnp.where(cosine > th, phi, cosine - mm)

        # Fused one-hot blend; iota offset by this block's global column start.
        col = jax.lax.broadcasted_iota(jnp.int32, cosine.shape, 1)
        col = col + j * cosine.shape[1]
        o_ref[...] = jnp.where(col == label_ref[...], phi, cosine) * s

    return arccos_kernel


@functools.partial(jax.jit, static_argnames=("s", "m", "tm", "tn"))
def arccos_forward(x, weight, label, *, s=30.0, m=0.5, tm=128, tn=256):
    """x: (B, F) float, weight: (O, F) float, label: (B,) int -> (B, O) f32."""
    B, F = x.shape
    O, F2 = weight.shape
    assert F == F2, "in_features mismatch"
    assert tm % 8 == 0 and tn % 128 == 0, "tm must be a multiple of 8, tn of 128"

    # Pad to lane/sublane-aligned, tile-divisible shapes (zero pads are
    # mathematically inert for both the norms and the dot products).
    Bp = _round_up(B, 8)
    Op = _round_up(O, 128)
    Fp = _round_up(F, 128)
    tm = min(tm, Bp)
    tn = min(tn, Op)
    Bp = _round_up(Bp, tm)
    Op = _round_up(Op, tn)

    x_p = jnp.pad(x, ((0, Bp - B), (0, Fp - F)))
    w_p = jnp.pad(weight, ((0, Op - O), (0, Fp - F)))
    lbl = jnp.pad(label.reshape(B).astype(jnp.int32), (0, Bp - B),
                  constant_values=-1).reshape(Bp, 1)

    # Per-class inverse norms: an O-length vector computed once per call
    # (outside the kernel) so no weight-norm work is repeated per batch tile.
    inv_wn = jax.lax.rsqrt(
        jnp.maximum(jnp.sum(jnp.square(w_p.astype(jnp.float32)), axis=1), 1e-24)
    ).reshape(1, Op)

    grid = (Bp // tm, Op // tn)
    kernel = _make_arccos_kernel(s, m)

    out = pl.pallas_call(
        kernel,
        out_shape=jax.ShapeDtypeStruct((Bp, Op), jnp.float32),
        grid=grid,
        in_specs=[
            pl.BlockSpec((tm, Fp), lambda i, j: (i, 0)),   # x
            pl.BlockSpec((tn, Fp), lambda i, j: (j, 0)),   # weight
            pl.BlockSpec((1, tn), lambda i, j: (0, j)),    # inv weight norms
            pl.BlockSpec((tm, 1), lambda i, j: (i, 0)),    # labels
        ],
        out_specs=pl.BlockSpec((tm, tn), lambda i, j: (i, j)),
        compiler_params=pltpu.CompilerParams(
            dimension_semantics=("parallel", "parallel"),
            vmem_limit_bytes=32 * 1024 * 1024,
        ),
    )(x_p, w_p, inv_wn, lbl)

    return out[:B, :O]


def init_arccos_weight(key, in_features, out_features, dtype=jnp.float32):
    # kaiming_uniform_(a=sqrt(5)) on an (out, in) matrix -> U(-bound, bound)
    # with bound = sqrt(6 / ((1 + a^2) * fan_in)) = 1 / sqrt(fan_in).
    bound = 1.0 / math.sqrt(in_features)
    return jax.random.uniform(
        key, (out_features, in_features), dtype=dtype, minval=-bound, maxval=bound
    )


# ----------------------------- reference math ------------------------------
def _margin_head(cosine, label, s, m):
    cos_m, sin_m = math.cos(m), math.sin(m)
    th, mm_ = math.cos(math.pi - m), math.sin(math.pi - m) * m
    sine = jnp.sqrt(jnp.clip(1.0 - cosine * cosine, 0.0, 1.0))
    phi = cosine * cos_m - sine * sin_m
    phi = jnp.where(cosine > th, phi, cosine - mm_)
    one_hot = jax.nn.one_hot(label, cosine.shape[1], dtype=cosine.dtype)
    return (one_hot * phi + (1.0 - one_hot) * cosine) * s


def _check(x, weight, label, s, m, tm, tn):
    out = jax.block_until_ready(
        arccos_forward(x, weight, label, s=s, m=m, tm=tm, tn=tn))
    assert out.shape == (x.shape[0], weight.shape[0])
    assert out.dtype == jnp.float32

    xf = x.astype(jnp.float32)
    wf = weight.astype(jnp.float32)

    # (a) tight check vs. a reference that mirrors the kernel numerics
    #     (bf16 MXU inputs, f32 accumulation, post-matmul rsqrt scaling).
    inv_xn = jax.lax.rsqrt(jnp.maximum(jnp.sum(xf * xf, 1, keepdims=True), 1e-24))
    inv_wn = jax.lax.rsqrt(jnp.maximum(jnp.sum(wf * wf, 1, keepdims=True), 1e-24))
    dot = jax.lax.dot_general(
        x.astype(jnp.bfloat16), weight.astype(jnp.bfloat16),
        dimension_numbers=(((1,), (1,)), ((), ())),
        preferred_element_type=jnp.float32)
    ref_match = _margin_head(dot * inv_xn * inv_wn.T, label, s, m)
    err_a = float(jnp.max(jnp.abs(out - ref_match)))
    assert jnp.allclose(out, ref_match, atol=5e-3, rtol=5e-3), err_a

    # (b) sanity check vs. the fp32 PyTorch-faithful math (loose tolerance
    #     because the kernel feeds the MXU in bf16).
    xn = xf / jnp.maximum(jnp.linalg.norm(xf, axis=1, keepdims=True), 1e-12)
    wn = wf / jnp.maximum(jnp.linalg.norm(wf, axis=1, keepdims=True), 1e-12)
    ref_f32 = _margin_head((xn @ wn.T).astype(jnp.float32), label, s, m)
    err_b = float(jnp.max(jnp.abs(out - ref_f32)))
    assert jnp.allclose(out, ref_f32, atol=1e-1, rtol=5e-2), err_b


if __name__ == "__main__":
    key = jax.random.PRNGKey(0)
    k_x, k_w, k_l, k_x2, k_w2, k_l2 = jax.random.split(key, 6)
    s, m = 30.0, 0.5

    # Small but grid-exercising shapes: 2x2 grid with tm=8, tn=128.
    batch, in_features, out_features = 16, 128, 256
    x = jax.random.normal(k_x, (batch, in_features), dtype=jnp.float32)
    weight = init_arccos_weight(k_w, in_features, out_features)
    label = jax.random.randint(k_l, (batch,), 0, out_features, dtype=jnp.int32)
    _check(x, weight, label, s, m, tm=8, tn=128)

    # Non-aligned shapes to exercise the padding path (single-tile grid).
    b2, f2, o2 = 5, 96, 200
    x2 = jax.random.normal(k_x2, (b2, f2), dtype=jnp.float32)
    w2 = init_arccos_weight(k_w2, f2, o2)
    l2 = jax.random.randint(k_l2, (b2,), 0, o2, dtype=jnp.int32)
    _check(x2, w2, l2, s, m, tm=128, tn=256)

    print("KERNEL_OK")
</pallas_src>

<mosaic_0001>
module attributes {stable_mosaic.version = 11 : i64} {
  func.func @arccos_kernel(%arg0: i32, %arg1: i32, %arg2: memref<8x128xf32, #tpu.memory_space<vmem>>, %arg3: memref<128x128xf32, #tpu.memory_space<vmem>>, %arg4: memref<1x128xf32, #tpu.memory_space<vmem>>, %arg5: memref<8x1xi32, #tpu.memory_space<vmem>>, %arg6: memref<8x128xf32, #tpu.memory_space<vmem>>) attributes {dimension_semantics = [#tpu.dimension_semantics<parallel>, #tpu.dimension_semantics<parallel>], iteration_bounds = array<i64: 2, 2>, scalar_prefetch = 0 : i64, scratch_operands = 0 : i64, tpu.core_type = #tpu.core_type<tc>, window_params = [{transform_indices = @transform_0, window_bounds = array<i64: 8, 128>}, {transform_indices = @transform_1, window_bounds = array<i64: 128, 128>}, {transform_indices = @transform_2, window_bounds = array<i64: 1, 128>}, {transform_indices = @transform_3, window_bounds = array<i64: 8, 1>}, {transform_indices = @transform_4, window_bounds = array<i64: 8, 128>}]} {
    %c0 = arith.constant 0 : index
    %c0_0 = arith.constant 0 : index
    %0 = vector.load %arg2[%c0, %c0_0] : memref<8x128xf32, #tpu.memory_space<vmem>>, vector<8x128xf32>
    %1 = arith.mulf %0, %0 : vector<8x128xf32>
    %cst = arith.constant dense<0.000000e+00> : vector<8xf32>
    %2 = vector.multi_reduction <add>, %1, %cst [1] : vector<8x128xf32> to vector<8xf32>
    %3 = vector.shape_cast %2 : vector<8xf32> to vector<8x1xf32>
    %cst_1 = arith.constant 1.000000e-24 : f32
    %4 = vector.broadcast %cst_1 : f32 to vector<8x1xf32>
    %5 = arith.maximumf %3, %4 : vector<8x1xf32>
    %6 = math.rsqrt %5 : vector<8x1xf32>
    %7 = arith.truncf %0 : vector<8x128xf32> to vector<8x128xbf16>
    %c0_2 = arith.constant 0 : index
    %c0_3 = arith.constant 0 : index
    %8 = vector.load %arg3[%c0_2, %c0_3] : memref<128x128xf32, #tpu.memory_space<vmem>>, vector<128x128xf32>
    %9 = arith.truncf %8 : vector<128x128xf32> to vector<128x128xbf16>
    %cst_4 = arith.constant dense<0.000000e+00> : vector<8x128xf32>
    %10 = tpu.matmul %7, %9, %cst_4 {dimension_numbers = #tpu.dot_dimension_numbers<[1], [1], [0], [0], [0, 0, 1, 0], [], []>} : vector<8x128xbf16>, vector<128x128xbf16>, vector<8x128xf32> -> vector<8x128xf32>
    %11 = vector.broadcast %6 : vector<8x1xf32> to vector<8x128xf32>
    %12 = arith.mulf %10, %11 : vector<8x128xf32>
    %c0_5 = arith.constant 0 : index
    %c0_6 = arith.constant 0 : index
    %13 = vector.load %arg4[%c0_5, %c0_6] : memref<1x128xf32, #tpu.memory_space<vmem>>, vector<1x128xf32>
    %14 = vector.broadcast %13 : vector<1x128xf32> to vector<8x128xf32>
    %15 = arith.mulf %12, %14 : vector<8x128xf32>
    %16 = arith.mulf %15, %15 : vector<8x128xf32>
    %cst_7 = arith.constant 1.000000e+00 : f32
    %17 = vector.broadcast %cst_7 : f32 to vector<8x128xf32>
    %18 = arith.subf %17, %16 : vector<8x128xf32>
    %cst_8 = arith.constant 0.000000e+00 : f32
    %cst_9 = arith.constant 1.000000e+00 : f32
    %19 = vector.broadcast %cst_8 : f32 to vector<8x128xf32>
    %20 = arith.maximumf %19, %18 : vector<8x128xf32>
    %21 = vector.broadcast %cst_9 : f32 to vector<8x128xf32>
    %22 = arith.minimumf %21, %20 : vector<8x128xf32>
    %23 = math.sqrt %22 : vector<8x128xf32>
    %cst_10 = arith.constant 0.87758255 : f32
    %24 = vector.broadcast %cst_10 : f32 to vector<8x128xf32>
    %25 = arith.mulf %15, %24 : vector<8x128xf32>
    %cst_11 = arith.constant 0.47942555 : f32
    %26 = vector.broadcast %cst_11 : f32 to vector<8x128xf32>
    %27 = arith.mulf %23, %26 : vector<8x128xf32>
    %28 = arith.subf %25, %27 : vector<8x128xf32>
    %cst_12 = arith.constant -0.87758255 : f32
    %29 = vector.broadcast %cst_12 : f32 to vector<8x128xf32>
    %30 = arith.cmpf ogt, %15, %29 : vector<8x128xf32>
    %cst_13 = arith.constant 0.239712775 : f32
    %31 = vector.broadcast %cst_13 : f32 to vector<8x128xf32>
    %32 = arith.subf %15, %31 : vector<8x128xf32>
    %33 = arith.select %30, %28, %32 : vector<8x128xi1>, vector<8x128xf32>
    %34 = tpu.iota {dimensions = array<i32: 1>} : vector<8x128xi32>
    %c128_i32 = arith.constant 128 : i32
    %35 = arith.muli %arg1, %c128_i32 : i32
    %36 = vector.broadcast %35 : i32 to vector<8x128xi32>
    %37 = arith.addi %34, %36 : vector<8x128xi32>
    %c0_14 = arith.constant 0 : index
    %c0_15 = arith.constant 0 : index
    %38 = vector.load %arg5[%c0_14, %c0_15] : memref<8x1xi32, #tpu.memory_space<vmem>>, vector<8x1xi32>
    %39 = vector.broadcast %38 : vector<8x1xi32> to vector<8x128xi32>
    %40 = arith.cmpi eq, %37, %39 : vector<8x128xi32>
    %41 = arith.select %40, %33, %15 : vector<8x128xi1>, vector<8x128xf32>
    %cst_16 = arith.constant 3.000000e+01 : f32
    %42 = vector.broadcast %cst_16 : f32 to vector<8x128xf32>
    %43 = arith.mulf %41, %42 : vector<8x128xf32>
    %c0_17 = arith.constant 0 : index
    %c0_18 = arith.constant 0 : index
    %44 = vector.load %arg6[%c0_17, %c0_18] : memref<8x128xf32, #tpu.memory_space<vmem>>, vector<8x128xf32>
    tpu.vector_store %arg6[%c0_17, %c0_18], %43 {strides = array<i32>} : memref<8x128xf32, #tpu.memory_space<vmem>>, vector<8x128xf32>,
    return
  }
  func.func @transform_0(%arg0: i32, %arg1: i32) -> (i32, i32) {
    %c0_i32 = arith.constant 0 : i32
    %c0_i32_0 = arith.constant 0 : i32
    return %arg0, %c0_i32 : i32, i32
  }
  func.func @transform_1(%arg0: i32, %arg1: i32) -> (i32, i32) {
    %c0_i32 = arith.constant 0 : i32
    %c0_i32_0 = arith.constant 0 : i32
    return %arg1, %c0_i32 : i32, i32
  }
  func.func @transform_2(%arg0: i32, %arg1: i32) -> (i32, i32) {
    %c0_i32 = arith.constant 0 : i32
    %c0_i32_0 = arith.constant 0 : i32
    return %c0_i32, %arg1 : i32, i32
  }
  func.func @transform_3(%arg0: i32, %arg1: i32) -> (i32, i32) {
    %c0_i32 = arith.constant 0 : i32
    %c0_i32_0 = arith.constant 0 : i32
    return %arg0, %c0_i32 : i32, i32
  }
  func.func @transform_4(%arg0: i32, %arg1: i32) -> (i32, i32) {
    %c0_i32 = arith.constant 0 : i32
    return %arg0, %arg1 : i32, i32
  }
}

</mosaic_0001>

<llo_original>
// kernel: arccos_forward.1
$region0: #{arccos_forward.1}
  #allocation0 [shape = 'u32[]', space=smem, size = 0x4, offset = 0x4, fixed_abs, tag = 'smem constant byte address 0x4 - core index']
  #allocation1 [shape = 'u32[72,128]{1,0:T(1,128)}', space=vmem, size = 0x9000, scoped, tag = 'internal scratch']
  %s0 = inlined_call_operand.vmem [shape: f32[16,128], index: 0, kind: input, shape index: {}]
  %s1 = inlined_call_operand.vmem [shape: f32[256,128], index: 1, kind: input, shape index: {}]
  %s2 = inlined_call_operand.vmem [shape: f32[1,256], index: 2, kind: input, shape index: {}]
  %s3 = inlined_call_operand.vmem [shape: s32[16,1], index: 3, kind: input, shape index: {}]
  %s4 = inlined_call_operand.hbm [shape: f32[16,256], index: 4, kind: output, shape index: {}]
  %s5 = sld [smem:[#allocation0]]
  $region49: #{arccos_forward.1} parent=0
    _
  %s7 = ssub.s32 1, %s5
  %s8 = scalar_select 0, %s7, %s5
  $region1: #{arccos_forward.1} parent=0
    #allocation2 [shape = 'u8[8192]{0}', space=vmem, size = 0x2000, scoped, tag = 'output window, operand 0']
    #allocation3 [shape = 's32[2]{0}', space=sflag, size = 0x8, scoped, tag = 'scoped memory for arccos_forward.1']
    %9 = vsyncpa [#allocation3], 0
    %s10 = scalar_lea.sflag [#allocation3], 1
    %11 = vsyncpa %s10, 0
    loop: start=0, step=1, limit=6
    $region2: #{arccos_forward.1} parent=1 // loop_pre_header
      _
    $region3: #{arccos_forward.1} parent=1 // loop_header
      %s13 = sphi 0, %s17
      %p14 = scmp.ge.s32.totalorder %s13, 6
      %s20 = sphi 0, %s32
      %s21 = sphi 0, %s28
      %s22 = sphi 0, %s20
      %s23 = sphi 0, %s21
      %s24 = sphi 0, %s22
      %s25 = sphi 0, %s23
      %s35 = sphi 0, %s37
      %s38 = sphi 0, %s35
      %s39 = sphi 0, %s38
      %s55 = sphi 0, %s39
      %s61 = sphi 0, %s63
      %s64 = sphi 0, %s61
      %s65 = sphi 0, %s64
      %s81 = sphi 0, %s65
      %s87 = sphi 0, %s89
      %s90 = sphi 0, %s87
      %s91 = sphi 0, %s90
      %s107 = sphi 0, %s91
      %s113 = sphi 0, %s115
      %s116 = sphi 0, %s113
      %s117 = sphi 0, %s116
      %s133 = sphi 0, %s117
      %s141 = sphi 0, %s143
      %s144 = sphi 0, %s141
      %s145 = sphi 0, %s144
      %s161 = sphi 0, %s145
    $region4: #{arccos_forward.1} parent=1 // loop_header_branch
      %16 = sbr.rel (%p14) target = $region8
    $region5: #{arccos_forward.1} parent=1 // loop_body
      %s18 = ssub.s32 %s13, 1
      %s19 = ssub.s32 %s13, 2
      %s26 = sadd.s32 1, %s21
      %p27 = scmp.ge.s32.totalorder %s26, 2
      %s28 = scalar_select %p27, 0, %s26
      %s29 = sadd.s32 1, %s20
      %s30 = scalar_select %p27, %s29, %s20
      %p31 = scmp.ge.s32.totalorder %s30, 2
      %s32 = scalar_select %p31, 0, %s30
      %s33 = ssub.s32 %s20, %s32
      %p34 = scmp.eq.s32.totalorder %s33, 0
      %s36 = sadd.s32 %s35, 1
      %s37 = scalar_select %p34, %s35, %s36
      %p40 = pneg %p34
      %p41 = scmp.eq.s32.totalorder %s13, 3
      %p42 = por %p40, %p41
      %p43 = scmp.ne.s32.totalorder %s35, %s38
      %p44 = scmp.eq.s32.totalorder %s13, 0
      %p45 = por %p43, %p44
      %p46 = scmp.ne.s32.totalorder %s35, %s38
      %p47 = scmp.eq.s32.totalorder %s18, 3
      %p48 = por %p46, %p47
      %p49 = scmp.ne.s32.totalorder %s38, %s39
      %p50 = scmp.eq.s32.totalorder %s18, 0
      %p51 = por %p49, %p50
      %p52 = scmp.ne.s32.totalorder %s38, %s39
      %p53 = scmp.eq.s32.totalorder %s19, 3
      %p54 = por %p52, %p53
      %p56 = scmp.ne.s32.totalorder %s39, %s55
      %p57 = scmp.eq.s32.totalorder %s19, 0
      %p58 = por %p56, %p57
      %s59 = ssub.s32 %s21, %s28
      %p60 = scmp.eq.s32.totalorder %s59, 0
      %s62 = sadd.s32 %s61, 1
      %s63 = scalar_select %p60, %s61, %s62
      %p66 = pneg %p60
      %p67 = scmp.eq.s32.totalorder %s13, 3
      %p68 = por %p66, %p67
      %p69 = scmp.ne.s32.totalorder %s61, %s64
      %p70 = scmp.eq.s32.totalorder %s13, 0
      %p71 = por %p69, %p70
      %p72 = scmp.ne.s32.totalorder %s61, %s64
      %p73 = scmp.eq.s32.totalorder %s18, 3
      %p74 = por %p72, %p73
      %p75 = scmp.ne.s32.totalorder %s64, %s65
      %p76 = scmp.eq.s32.totalorder %s18, 0
      %p77 = por %p75, %p76
      %p78 = scmp.ne.s32.totalorder %s64, %s65
      %p79 = scmp.eq.s32.totalorder %s19, 3
      %p80 = por %p78, %p79
      %p82 = scmp.ne.s32.totalorder %s65, %s81
      %p83 = scmp.eq.s32.totalorder %s19, 0
      %p84 = por %p82, %p83
      %s85 = ssub.s32 %s21, %s28
      %p86 = scmp.eq.s32.totalorder %s85, 0
      %s88 = sadd.s32 %s87, 1
      %s89 = scalar_select %p86, %s87, %s88
      %p92 = pneg %p86
      %p93 = scmp.eq.s32.totalorder %s13, 3
      %p94 = por %p92, %p93
      %p95 = scmp.ne.s32.totalorder %s87, %s90
      %p96 = scmp.eq.s32.totalorder %s13, 0
      %p97 = por %p95, %p96
      %p98 = scmp.ne.s32.totalorder %s87, %s90
      %p99 = scmp.eq.s32.totalorder %s18, 3
      %p100 = por %p98, %p99
      %p101 = scmp.ne.s32.totalorder %s90, %s91
      %p102 = scmp.eq.s32.totalorder %s18, 0
      %p103 = por %p101, %p102
      %p104 = scmp.ne.s32.totalorder %s90, %s91
      %p105 = scmp.eq.s32.totalorder %s19, 3
      %p106 = por %p104, %p105
      %p108 = scmp.ne.s32.totalorder %s91, %s107
      %p109 = scmp.eq.s32.totalorder %s19, 0
      %p110 = por %p108, %p109
      %s111 = ssub.s32 %s20, %s32
      %p112 = scmp.eq.s32.totalorder %s111, 0
      %s114 = sadd.s32 %s113, 1
      %s115 = scalar_select %p112, %s113, %s114
      %p118 = pneg %p112
      %p119 = scmp.eq.s32.totalorder %s13, 3
      %p120 = por %p118, %p119
      %p121 = scmp.ne.s32.totalorder %s113, %s116
      %p122 = scmp.eq.s32.totalorder %s13, 0
      %p123 = por %p121, %p122
      %p124 = scmp.ne.s32.totalorder %s113, %s116
      %p125 = scmp.eq.s32.totalorder %s18, 3
      %p126 = por %p124, %p125
      %p127 = scmp.ne.s32.totalorder %s116, %s117
      %p128 = scmp.eq.s32.totalorder %s18, 0
      %p129 = por %p127, %p128
      %p130 = scmp.ne.s32.totalorder %s116, %s117
      %p131 = scmp.eq.s32.totalorder %s19, 3
      %p132 = por %p130, %p131
      %p134 = scmp.ne.s32.totalorder %s117, %s133
      %p135 = scmp.eq.s32.totalorder %s19, 0
      %p136 = por %p134, %p135
      %s137 = ssub.s32 %s20, %s32
      %s138 = ssub.s32 %s21, %s28
      %s139 = sor.u32 %s137, %s138
      %p140 = scmp.eq.s32.totalorder %s139, 0
      %s142 = sadd.s32 %s141, 1
      %s143 = scalar_select %p140, %s141, %s142
      %p146 = pneg %p140
      %p147 = scmp.eq.s32.totalorder %s13, 3
      %p148 = por %p146, %p147
      %p149 = scmp.ne.s32.totalorder %s141, %s144
      %p150 = scmp.eq.s32.totalorder %s13, 0
      %p151 = por %p149, %p150
      %p152 = scmp.ne.s32.totalorder %s141, %s144
      %p153 = scmp.eq.s32.totalorder %s18, 3
      %p154 = por %p152, %p153
      %p155 = scmp.ne.s32.totalorder %s144, %s145
      %p156 = scmp.eq.s32.totalorder %s18, 0
      %p157 = por %p155, %p156
      %p158 = scmp.ne.s32.totalorder %s144, %s145
      %p159 = scmp.eq.s32.totalorder %s19, 3
      %p160 = por %p158, %p159
      %p162 = scmp.ne.s32.totalorder %s145, %s161
      %p163 = scmp.eq.s32.totalorder %s19, 0
      %p164 = por %p162, %p163
      %p165 = scmp.le.s32.totalorder 1, %s13
      %p166 = scmp.lt.s32.totalorder %s13, 5
      %p167 = pnand %p165, %p166
      %p168 = pneg %p167
      // Predicated region
      $region9: #{arccos_forward.1} parent=5 // pred_check
        _
      $region10: #{arccos_forward.1} parent=5 // pred_check_branch
        %170 = sbr.rel (%p167) target = $region12
      $region11: #{arccos_forward.1} parent=5 // pred_region
        %s171 = ssub.s32 %s13, 1
      $region12: #{arccos_forward.1} parent=5 // pred_fallthru
        _
      %p172 = scmp.lt.s32.totalorder %s13, 4
      // Predicated region
      $region13: #{arccos_forward.1} parent=5 // pred_check
        %p173 = pneg %p172
      $region14: #{arccos_forward.1} parent=5 // pred_check_branch
        %175 = sbr.rel (%p173) target = $region16
      $region15: #{arccos_forward.1} parent=5 // pred_region
        // Predicated region
        $region17: #{arccos_forward.1} parent=15 // pred_check
          %p176 = pneg %p45
        $region18: #{arccos_forward.1} parent=15 // pred_check_branch
          %178 = sbr.rel (%p176) target = $region20
        $region19: #{arccos_forward.1} parent=15 // pred_region
          %p179 = scmp.lt.s32.totalorder %s20, 1
          %s180 = scalar_select %p179, %s20, 1
          %s181 = smul.addr %s180, 8
          %s182 = scalar_lea.vmem %s0, %s181
        $region20: #{arccos_forward.1} parent=15 // pred_fallthru
          _
        // Predicated region
        $region21: #{arccos_forward.1} parent=15 // pred_check
          %p183 = pneg %p71
        $region22: #{arccos_forward.1} parent=15 // pred_check_branch
          %185 = sbr.rel (%p183) target = $region24
        $region23: #{arccos_forward.1} parent=15 // pred_region
          %s186 = smul.u32 16, %s21
          %p187 = scmp.lt.s32.totalorder %s186, 31
          %s188 = scalar_select %p187, %s186, 31
          %s189 = smul.addr %s188, 8
          %s190 = scalar_lea.vmem %s1, %s189
          %s191 = smul.u32 16, %s21
        $region24: #{arccos_forward.1} parent=15 // pred_fallthru
          _
        // Predicated region
        $region25: #{arccos_forward.1} parent=15 // pred_check
          %p192 = pneg %p97
        $region26: #{arccos_forward.1} parent=15 // pred_check_branch
          %194 = sbr.rel (%p192) target = $region28
        $region27: #{arccos_forward.1} parent=15 // pred_region
          %p195 = scmp.lt.s32.totalorder %s21, 1
          %s196 = scalar_select %p195, %s21, 1
          %s197 = scalar_lea.vmem %s2, %s196
        $region28: #{arccos_forward.1} parent=15 // pred_fallthru
          _
        // Predicated region
        $region29: #{arccos_forward.1} parent=15 // pred_check
          %p198 = pneg %p123
        $region30: #{arccos_forward.1} parent=15 // pred_check_branch
          %200 = sbr.rel (%p198) target = $region32
        $region31: #{arccos_forward.1} parent=15 // pred_region
          %p201 = scmp.lt.s32.totalorder %s20, 1
          %s202 = scalar_select %p201, %s20, 1
          %s203 = smul.addr %s202, 8
          %s204 = scalar_lea.vmem %s3, %s203
        $region32: #{arccos_forward.1} parent=15 // pred_fallthru
          _
      $region16: #{arccos_forward.1} parent=5 // pred_fallthru
        _
      %p205 = scmp.le.s32.totalorder 1, %s13
      %p206 = scmp.lt.s32.totalorder %s13, 5
      %p207 = pnand %p205, %p206
      %p208 = pneg %p207
      // Predicated region
      $region33: #{arccos_forward.1} parent=5 // pred_check
        _
      $region34: #{arccos_forward.1} parent=5 // pred_check_branch
        %210 = sbr.rel (%p207) target = $region36
      $region35: #{arccos_forward.1} parent=5 // pred_region
        %s211 = ssub.s32 %s13, 1
        %p212 = scmp.lt.s32.totalorder %s22, 1
        %s213 = scalar_select %p212, %s22, 1
        %s214 = smul.addr %s213, 8
        %s215 = scalar_lea.vmem %s0, %s214
        %p216 = pneg %p51
        %p217 = pneg %p48
        %s218 = smul.u32 16, %s23
        %p219 = scmp.lt.s32.totalorder %s218, 31
        %s220 = scalar_select %p219, %s218, 31
        %s221 = smul.addr %s220, 8
        %s222 = scalar_lea.vmem %s1, %s221
        %p223 = pneg %p77
        %p224 = pneg %p74
        %p225 = scmp.lt.s32.totalorder %s23, 1
        %s226 = scalar_select %p225, %s23, 1
        %s227 = scalar_lea.vmem %s2, %s226
        %p228 = pneg %p103
        %p229 = pneg %p100
        %p230 = scmp.lt.s32.totalorder %s22, 1
        %s231 = scalar_select %p230, %s22, 1
        %s232 = smul.addr %s231, 8
        %s233 = scalar_lea.vmem %s3, %s232
        %p234 = pneg %p129
        %p235 = pneg %p126
        %p236 = pneg %p157
        %p237 = pneg %p154
        %s238 = sand.u32 %s144, 1
        %s239 = scalar_lea.sflag [#allocation3], %s238
        %s240 = sand.u32 %s144, 1
        %s241 = smul.addr %s240, 8
        %s242 = scalar_lea.vmem [#allocation2], %s241
        %p243 = scmp.lt.s32.totalorder %s22, 1
        %s244 = scalar_select %p243, %s22, 1
        %s245 = smul.addr %s244, 8
        %s246 = scalar_lea.vmem %s0, %s245
        %s247 = smul.u32 16, %s23
        %p248 = scmp.lt.s32.totalorder %s247, 31
        %s249 = scalar_select %p248, %s247, 31
        %s250 = smul.addr %s249, 8
        %s251 = scalar_lea.vmem %s1, %s250
        %s252 = smul.u32 16, %s23
        %p253 = scmp.lt.s32.totalorder %s23, 1
        %s254 = scalar_select %p253, %s23, 1
        %s255 = scalar_lea.vmem %s2, %s254
        %p256 = scmp.lt.s32.totalorder %s22, 1
        %s257 = scalar_select %p256, %s22, 1
        %s258 = smul.addr %s257, 8
        %s259 = scalar_lea.vmem %s3, %s258
        %v260 = vld [vmem:[%s246] sm:$0xff]
        %v261 = vmul.f32 %v260, %v260
        %262 = vadd.xlane.f32.xlu0 %v261
        %v263 = vpop.xlane.xlu0 %262
        %v264 = vmax.f32 %v263, 1e-24
        %v265 = vrsqrt.pop %v264
        %v266 = vmul.f32 %v265, %v264
        %v267 = vmul.f32 %v266, %v265
        %v268 = vmul.f32 0.5, %v267
        %v269 = vsub.f32 1.5, %v268
        %v270 = vmul.f32 %v265, %v269
        %vm271 = vweird.f32 %v264
        %vm272 = vweird.f32 %v265
        %vm273 = vmor %vm271, %vm272
        %v274 = vsel %vm273, %v265, %v270
        %v275 = vpack.c.bf16 %v260, %v260
        %v276 = vld [vmem:[%s251] sm:$0xff]
        %v277 = vld [vmem:[%s251 + $0x8] sm:$0xff]
        %v278 = vld [vmem:[%s251 + $0x10] sm:$0xff]
        %v279 = vld [vmem:[%s251 + $0x18] sm:$0xff]
        %v280 = vld [vmem:[%s251 + $0x20] sm:$0xff]
        %v281 = vld [vmem:[%s251 + $0x28] sm:$0xff]
        %v282 = vld [vmem:[%s251 + $0x30] sm:$0xff]
        %v283 = vld [vmem:[%s251 + $0x38] sm:$0xff]
        %v284 = vld [vmem:[%s251 + $0x40] sm:$0xff]
        %v285 = vld [vmem:[%s251 + $0x48] sm:$0xff]
        %v286 = vld [vmem:[%s251 + $0x50] sm:$0xff]
        %v287 = vld [vmem:[%s251 + $0x58] sm:$0xff]
        %v288 = vld [vmem:[%s251 + $0x60] sm:$0xff]
        %v289 = vld [vmem:[%s251 + $0x68] sm:$0xff]
        %v290 = vld [vmem:[%s251 + $0x70] sm:$0xff]
        %v291 = vld [vmem:[%s251 + $0x78] sm:$0xff]
        %v292 = vpack.c.bf16 %v277, %v276
        %v293 = vpack.c.bf16 %v279, %v278
        %v294 = vpack.c.bf16 %v281, %v280
        %v295 = vpack.c.bf16 %v283, %v282
        %v296 = vpack.c.bf16 %v285, %v284
        %v297 = vpack.c.bf16 %v287, %v286
        %v298 = vpack.c.bf16 %v289, %v288
        %v299 = vpack.c.bf16 %v291, %v290
        %300 = vmatpush.bf16.xpose.msra.mxu0 %v299
        %301 = vmatpush.bf16.xpose.msra.mxu0 %v298
        %302 = vmatpush.bf16.xpose.msra.mxu0 %v297
        %303 = vmatpush.bf16.xpose.msra.mxu0 %v296
        %304 = vmatpush.bf16.xpose.msra.mxu0 %v295
        %305 = vmatpush.bf16.xpose.msra.mxu0 %v294
        %306 = vmatpush.bf16.xpose.msra.mxu0 %v293
        %307 = vmatpush.bf16.xpose.msra.mxu0 %v292
        %308 = vmatmul.bf16.gmra.mxu0 %v275
        %v309 = vpop.f32.mrf.mxu0
        %v310 = vadd.f32 0.0, %v309
        %v311 = vpop.f32.mrf.mxu0
        %312 = vdwg.mxu0
        %v313 = vmul.f32 %v310, %v274
        %v314 = vld [vmem:[%s255] sm:$0x1]
        %v316 = vperm.slane %v314, 0
        %v318 = vmul.f32 %v313, %v316
        %v319 = vmul.f32 %v318, %v318
        %v320 = vsub.f32 1.0, %v319
        %v321 = vmax.f32 %v320, 0.0
        %v322 = vmin.f32 %v321, 1.0
        %v323 = vrsqrt.pop %v322
        %v324 = vmul.f32 %v323, %v322
        %v325 = vmul.f32 %v324, %v323
        %v326 = vmul.f32 0.5, %v325
        %v327 = vsub.f32 1.5, %v326
        %v328 = vmul.f32 %v323, %v327
        %v329 = vmul.f32 %v322, %v328
        %vm330 = vcmp.eq.f32.partialorder %v322, inf
        %v331 = vsel %vm330, %v322, %v329
        %vm332 = vcmp.eq.f32.partialorder %v322, 0.0
        %v333 = vand.u32 %v322, 2147483648
        %v334 = vsel %vm332, %v333, %v331
        %v335 = vmul.f32 %v318, 0.87758255
        %v336 = vmul.f32 %v334, 0.47942555
        %v337 = vsub.f32 %v335, %v336
        %vm338 = vcmp.gt.f32.partialorder %v318, -0.87758255
        %v339 = vsub.f32 %v318, 0.23971277
        %v340 = vsel %vm338, %v337, %v339
        %v341 = vlaneseq
        %v342 = vand.u32 %v341, 127
        %s343 = smul.u32 %s23, 128
        %v344 = vstv %s343
        %v345 = vadd.s32 %v342, %v344
        %v346 = vld [vmem:[%s259] sm:$0xff]
        %347 = vset.pattern.permute.xlu0 0
        %348 = vperm.xlu0 %347, %v346
        %v349 = vpop.permute.xlu0 %348
        %vm350 = vcmp.eq.s32.totalorder %v345, %v349
        %v351 = vsel %vm350, %v340, %v318
        %v352 = vmul.f32 %v351, 30.0
        %353 = vst [vmem:[%s242] sm:$0xff] %v352
        %s354 = sand.u32 %s144, 1
        %s355 = scalar_lea.sflag [#allocation3], %s354
        %s356 = sand.u32 %s144, 1
        %s357 = smul.addr %s356, 8
        %s358 = scalar_lea.vmem [#allocation2], %s357
        // Predicated region
        $region37: #{arccos_forward.1} parent=35 // pred_check
          %p359 = pneg %p154
        $region38: #{arccos_forward.1} parent=35 // pred_check_branch
          %361 = sbr.rel (%p359) target = $region40
        $region39: #{arccos_forward.1} parent=35 // pred_region
          %363 = vsyncadd %s355, 0
          %s364 = smul.addr %s22, 2
          %s365 = sadd.s32 %s23, %s364
          %s366 = smul.addr %s365, 8
          %s367 = scalar_lea.hbm %s4, %s366
          %s369 = sshll.u32 %s358, 4
          %s370 = int_to_ptr.vmem [resolvable:$true] %s369
          %s371 = sshll.u32 %s367, 4
          %s372 = int_to_ptr.hbm [resolvable:$true] %s371
          %374 = dma.vmem_to_hbm [thread:$0]  %s370, 128, %s372, %s355
        $region40: #{arccos_forward.1} parent=35 // pred_fallthru
          _
      $region36: #{arccos_forward.1} parent=5 // pred_fallthru
        _
      %p375 = scmp.le.s32.totalorder 2, %s13
      // Predicated region
      $region41: #{arccos_forward.1} parent=5 // pred_check
        %p376 = pneg %p375
      $region42: #{arccos_forward.1} parent=5 // pred_check_branch
        %378 = sbr.rel (%p376) target = $region44
      $region43: #{arccos_forward.1} parent=5 // pred_region
        %s379 = ssub.s32 %s13, 2
        // Predicated region
        $region45: #{arccos_forward.1} parent=43 // pred_check
          %p380 = pneg %p160
        $region46: #{arccos_forward.1} parent=43 // pred_check_branch
          %382 = sbr.rel (%p380) target = $region48
        $region47: #{arccos_forward.1} parent=43 // pred_region
          %s383 = sand.u32 %s145, 1
          %s384 = scalar_lea.sflag [#allocation3], %s383
          %s385 = sand.u32 %s145, 1
          %s386 = smul.addr %s385, 8
          %s387 = scalar_lea.vmem [#allocation2], %s386
          %389 = dma.done %s384, 128
        $region48: #{arccos_forward.1} parent=43 // pred_fallthru
          _
      $region44: #{arccos_forward.1} parent=5 // pred_fallthru
        _
    $region6: #{arccos_forward.1} parent=1 // loop_footer
      %s17 = sadd.s32 1, %s13
    $region7: #{arccos_forward.1} parent=1 // loop_footer_branch
      %12 = sbr.rel target = $region3
    $region8: #{arccos_forward.1} parent=1 // loop_exit
      _
    %390 = vsyncpa [#allocation3], 1
    %s391 = scalar_lea.sflag [#allocation3], 1
    %392 = vsyncpa %s391, 1

</llo_original>
